<compile_context>
chip_gen: v6e
topology: v6e:2x2x1
jax: 0.10.0
libtpu: 0.0.40
codegen_flags: <defaults>
</compile_context>

<pallas_src>
import jax
import jax.numpy as jnp
from jax.experimental import pallas as pl
from jax.experimental.pallas import tpu as pltpu

ALPHA = 1.0
GAMMA = 2.0  # implemented as an explicit square in-kernel (no float pow)


def _vmem_capacity_bytes():
    """Best-effort physical-VMEM query; conservative (v7x-sized) fallback."""
    try:
        info = pltpu.get_tpu_info()
        cap = getattr(info, "vmem_capacity_bytes", None)
        if cap:
            return int(cap)
    except Exception:
        pass
    return 64 * 1024 * 1024


def _make_focal_kernel(n_total, tile_n, tiles_per_core, final_scale):
    n_total = int(n_total)
    tile_n = int(tile_n)
    tiles_per_core = int(tiles_per_core)
    final_scale = float(final_scale)

    def kernel(logits_ref, targets_ref, out_ref):
        core = pl.program_id(0)   # "parallel" axis (both TensorCores on v7x)
        i = pl.program_id(1)      # "arbitrary" reduction axis (row tiles)

        # out_ref is this core's resident (8, 128) f32 accumulator block.
        @pl.when(i == 0)
        def _init():
            out_ref[...] = jnp.zeros_like(out_ref)

        x_raw = logits_ref[...]                  # (tile_n, C), native dtype
        x = x_raw.astype(jnp.float32)
        t = targets_ref[...]                     # (tile_n, 1) int32

        # Numerically stable per-row log-sum-exp (f32).
        m = jnp.max(x, axis=-1, keepdims=True)
        lse = m + jnp.log(jnp.sum(jnp.exp(x - m), axis=-1, keepdims=True))

        # Target-class logit: select on the *native-dtype* tile (halves the
        # compare/select bandwidth and avoids an extra full-tile f32 temp for
        # bf16 inputs); the row-sum is exact since only one lane is nonzero.
        cls = jax.lax.broadcasted_iota(jnp.int32, x_raw.shape, 1)
        sel = jnp.where(cls == t, x_raw, jnp.zeros_like(x_raw))
        tgt_logit = jnp.sum(sel, axis=-1, keepdims=True).astype(jnp.float32)

        ce = lse - tgt_logit                     # per-sample cross entropy
        pt = jnp.exp(-ce)
        u = 1.0 - pt
        focal = (ALPHA * u * u) * ce             # gamma=2 -> explicit square

        # Mask rows past the true N: covers the partial last tile and any
        # clamped duplicate tile on the second core (odd total tile count).
        logical_tile = core * tiles_per_core + i
        row = logical_tile * tile_n + jax.lax.broadcasted_iota(
            jnp.int32, focal.shape, 0)
        focal = jnp.where(row < n_total, focal, 0.0)

        # Broadcast-accumulate the tile partial into the whole (8, 128) block
        # (one vreg VPU add; the wrapper reads element [0, 0] of each block).
        out_ref[...] += jnp.sum(focal)

        # Finalize: scale once by 1/N (mean) or 1.0 (sum) per core partial.
        @pl.when(i == pl.num_programs(1) - 1)
        def _finalize():
            out_ref[...] = out_ref[...] * final_scale

    return kernel


def focal_loss(logits, targets, *, tile_n=None, reduction="mean"):
    """logits: (N, C) float (f32 or bf16), targets: (N,) int class indices.

    Returns a scalar f32 for reduction='mean' (default) or 'sum'.
    """
    n, c = logits.shape
    targets_2d = targets.astype(jnp.int32).reshape(n, 1)

    if reduction == "mean":
        scale = 1.0 / n
    elif reduction == "sum":
        scale = 1.0
    else:
        # TODO(synk): reduction='none' needs an (N,)-shaped output spec.
        raise NotImplementedError(
            f"reduction={reduction!r} not supported; use 'mean' or 'sum'")

    # ---- dtype- and generation-aware tile sizing -------------------------
    itemsize = jnp.dtype(logits.dtype).itemsize
    row_align = {4: 8, 2: 16, 1: 32}.get(itemsize, 8)  # sublane packing

    vmem_cap = _vmem_capacity_bytes()
    if vmem_cap >= 96 * 1024 * 1024:
        # v5e / v6e: 128 MiB physical VMEM per TensorCore -> bigger tiles.
        tile_budget = 40 * 1024 * 1024
        vmem_limit = 64 * 1024 * 1024
    else:
        # v7x (64 MiB / TC) or unknown: stay conservative (full-tile f32
        # temporaries sit on top of the double-buffered input block).
        tile_budget = 20 * 1024 * 1024
        vmem_limit = 32 * 1024 * 1024

    # Working-set bytes per row: 2x native-dtype input buffers (pipeline)
    # plus ~3 full-tile 4-byte temporaries (f32 upcast, exp(x-m), iota/select).
    bytes_per_row = c * (2 * itemsize + 4 * 3)
    max_rows_by_vmem = max(row_align, tile_budget // max(1, bytes_per_row))
    if tile_n is None:
        tile_n = max_rows_by_vmem
    tile_n = min(int(tile_n), max_rows_by_vmem)
    tile_n = max(row_align, (tile_n // row_align) * row_align)
    if n <= tile_n:
        tile_n = n  # single full block; full-dim block needs no alignment

    # ---- grid: (cores, row tiles per core) -------------------------------
    total_tiles = pl.cdiv(n, tile_n)
    num_cores = 2 if total_tiles >= 2 else 1
    tiles_per_core = pl.cdiv(total_tiles, num_cores)
    last_tile = total_tiles - 1

    # Clamp the block index so the second core's trailing (duplicate) step
    # never DMAs out of bounds; its contribution is masked to zero in-kernel.
    def logits_map(ci, ii):
        return (jnp.minimum(ci * tiles_per_core + ii, last_tile), 0)

    def targets_map(ci, ii):
        return (jnp.minimum(ci * tiles_per_core + ii, last_tile), 0)

    out = pl.pallas_call(
        _make_focal_kernel(n, tile_n, tiles_per_core, scale),
        out_shape=jax.ShapeDtypeStruct((num_cores * 8, 128), jnp.float32),
        grid_spec=pltpu.PrefetchScalarGridSpec(
            num_scalar_prefetch=0,
            grid=(num_cores, tiles_per_core),
            in_specs=[
                pl.BlockSpec((tile_n, c), logits_map),
                pl.BlockSpec((tile_n, 1), targets_map),
            ],
            out_specs=pl.BlockSpec((8, 128), lambda ci, ii: (ci, 0)),
        ),
        compiler_params=pltpu.CompilerParams(
            dimension_semantics=("parallel", "arbitrary"),
            vmem_limit_bytes=vmem_limit,
        ),
    )(logits, targets_2d)

    # Each core's scaled partial lives at [core*8, 0]; add them.
    return jnp.sum(out[0::8, 0])


def _focal_loss_ref(logits, targets, reduction="mean"):
    # Pure-JAX reference matching the PyTorch module.
    x = logits.astype(jnp.float32)
    lse = jax.scipy.special.logsumexp(x, axis=-1)
    tgt = jnp.take_along_axis(x, targets[:, None], axis=-1)[:, 0]
    ce = lse - tgt
    pt = jnp.exp(-ce)
    fl = ALPHA * (1.0 - pt) ** GAMMA * ce
    return jnp.mean(fl) if reduction == "mean" else jnp.sum(fl)


if __name__ == "__main__":
    key = jax.random.PRNGKey(0)
    k1, k2, k3, k4, k5, k6 = jax.random.split(key, 6)

    # Case 1: grid path, even core split, partial last tile (50 % 16 != 0).
    N1, C1 = 50, 32
    logits1 = jax.random.normal(k1, (N1, C1), dtype=jnp.float32)
    targets1 = jax.random.randint(k2, (N1,), 0, C1, dtype=jnp.int32)
    loss1 = focal_loss(logits1, targets1, tile_n=16)
    jax.block_until_ready(loss1)
    ref1 = _focal_loss_ref(logits1, targets1)
    assert jnp.allclose(loss1, ref1, rtol=1e-5, atol=1e-5), (loss1, ref1)

    # Case 2: odd tile count (3 tiles over 2 cores) -> clamped duplicate tile.
    N2, C2 = 40, 32
    logits2 = jax.random.normal(k3, (N2, C2), dtype=jnp.float32)
    targets2 = jax.random.randint(k4, (N2,), 0, C2, dtype=jnp.int32)
    loss2 = focal_loss(logits2, targets2, tile_n=16)
    jax.block_until_ready(loss2)
    ref2 = _focal_loss_ref(logits2, targets2)
    assert jnp.allclose(loss2, ref2, rtol=1e-5, atol=1e-5), (loss2, ref2)

    # Case 3: single-block path (N <= tile_n), auto tile sizing.
    N3, C3 = 8, 32
    logits3 = jax.random.normal(k5, (N3, C3), dtype=jnp.float32)
    targets3 = jax.random.randint(k6, (N3,), 0, C3, dtype=jnp.int32)
    loss3 = focal_loss(logits3, targets3)
    jax.block_until_ready(loss3)
    ref3 = _focal_loss_ref(logits3, targets3)
    assert jnp.allclose(loss3, ref3, rtol=1e-5, atol=1e-5), (loss3, ref3)

    # Case 4: bf16 logits -> 16-row-aligned tiles, native-dtype target select.
    logits4 = logits1.astype(jnp.bfloat16)
    loss4 = focal_loss(logits4, targets1, tile_n=32)
    jax.block_until_ready(loss4)
    ref4 = _focal_loss_ref(logits4, targets1)
    assert jnp.allclose(loss4, ref4, rtol=1e-5, atol=1e-5), (loss4, ref4)

    print("KERNEL_OK")
</pallas_src>

<mosaic_0001>
module attributes {stable_mosaic.version = 11 : i64} {
  func.func @kernel(%arg0: i32, %arg1: i32, %arg2: memref<16x32xf32, #tpu.memory_space<vmem>>, %arg3: memref<16x1xi32, #tpu.memory_space<vmem>>, %arg4: memref<8x128xf32, #tpu.memory_space<vmem>>) attributes {dimension_semantics = [#tpu.dimension_semantics<parallel>, #tpu.dimension_semantics<arbitrary>], iteration_bounds = array<i64: 2, 2>, scalar_prefetch = 0 : i64, scratch_operands = 0 : i64, tpu.core_type = #tpu.core_type<tc>, window_params = [{transform_indices = @transform_0, window_bounds = array<i64: 16, 32>}, {transform_indices = @transform_1, window_bounds = array<i64: 16, 1>}, {transform_indices = @transform_2, window_bounds = array<i64: 8, 128>}]} {
    %c0_i32 = arith.constant 0 : i32
    %0 = arith.cmpi eq, %arg1, %c0_i32 : i32
    %1 = arith.extui %0 : i1 to i32
    %c0_i32_0 = arith.constant 0 : i32
    %2 = arith.cmpi ne, %1, %c0_i32_0 : i32
    scf.if %2 {
      %cst_17 = arith.constant 0.000000e+00 : f32
      %52 = vector.broadcast %cst_17 : f32 to vector<8x128xf32>
      %c0_18 = arith.constant 0 : index
      %c0_19 = arith.constant 0 : index
      %53 = vector.load %arg4[%c0_18, %c0_19] : memref<8x128xf32, #tpu.memory_space<vmem>>, vector<8x128xf32>
      tpu.vector_store %arg4[%c0_18, %c0_19], %52 {strides = array<i32>} : memref<8x128xf32, #tpu.memory_space<vmem>>, vector<8x128xf32>,
    } else {
    }
    %c0 = arith.constant 0 : index
    %c0_1 = arith.constant 0 : index
    %3 = vector.load %arg2[%c0, %c0_1] : memref<16x32xf32, #tpu.memory_space<vmem>>, vector<16x32xf32>
    %c0_2 = arith.constant 0 : index
    %c0_3 = arith.constant 0 : index
    %4 = vector.load %arg3[%c0_2, %c0_3] : memref<16x1xi32, #tpu.memory_space<vmem>>, vector<16x1xi32>
    %cst = arith.constant dense<0xFF800000> : vector<16xf32>
    %5 = vector.multi_reduction <maximumf>, %3, %cst [1] : vector<16x32xf32> to vector<16xf32>
    %6 = vector.shape_cast %5 : vector<16xf32> to vector<16x1xf32>
    %7 = vector.broadcast %6 : vector<16x1xf32> to vector<16x32xf32>
    %8 = arith.subf %3, %7 : vector<16x32xf32>
    %9 = math.exp %8 : vector<16x32xf32>
    %cst_4 = arith.constant dense<0.000000e+00> : vector<16xf32>
    %10 = vector.multi_reduction <add>, %9, %cst_4 [1] : vector<16x32xf32> to vector<16xf32>
    %11 = vector.shape_cast %10 : vector<16xf32> to vector<16x1xf32>
    %12 = math.log %11 : vector<16x1xf32>
    %13 = arith.addf %6, %12 : vector<16x1xf32>
    %14 = tpu.iota {dimensions = array<i32: 1>} : vector<16x32xi32>
    %15 = vector.broadcast %4 : vector<16x1xi32> to vector<16x32xi32>
    %16 = arith.cmpi eq, %14, %15 : vector<16x32xi32>
    %cst_5 = arith.constant 0.000000e+00 : f32
    %17 = vector.broadcast %cst_5 : f32 to vector<16x32xf32>
    %18 = arith.select %16, %3, %17 : vector<16x32xi1>, vector<16x32xf32>
    %cst_6 = arith.constant dense<0.000000e+00> : vector<16xf32>
    %19 = vector.multi_reduction <add>, %18, %cst_6 [1] : vector<16x32xf32> to vector<16xf32>
    %20 = vector.shape_cast %19 : vector<16xf32> to vector<16x1xf32>
    %21 = arith.subf %13, %20 : vector<16x1xf32>
    %cst_7 = arith.constant 0.000000e+00 : f32
    %22 = vector.broadcast %cst_7 : f32 to vector<16x1xf32>
    %23 = arith.subf %22, %21 : vector<16x1xf32>
    %24 = math.exp %23 : vector<16x1xf32>
    %cst_8 = arith.constant 1.000000e+00 : f32
    %25 = vector.broadcast %cst_8 : f32 to vector<16x1xf32>
    %26 = arith.subf %25, %24 : vector<16x1xf32>
    %cst_9 = arith.constant 1.000000e+00 : f32
    %27 = vector.broadcast %cst_9 : f32 to vector<16x1xf32>
    %28 = arith.mulf %27, %26 : vector<16x1xf32>
    %29 = arith.mulf %28, %26 : vector<16x1xf32>
    %30 = arith.mulf %29, %21 : vector<16x1xf32>
    %c2_i32 = arith.constant 2 : i32
    %31 = arith.muli %arg0, %c2_i32 : i32
    %32 = arith.addi %31, %arg1 : i32
    %c16_i32 = arith.constant 16 : i32
    %33 = arith.muli %32, %c16_i32 : i32
    %34 = tpu.iota {dimensions = array<i32: 0>} : vector<16x1xi32>
    %35 = vector.broadcast %33 : i32 to vector<16x1xi32>
    %36 = arith.addi %35, %34 : vector<16x1xi32>
    %c50_i32 = arith.constant 50 : i32
    %37 = vector.broadcast %c50_i32 : i32 to vector<16x1xi32>
    %38 = arith.cmpi slt, %36, %37 : vector<16x1xi32>
    %cst_10 = arith.constant 0.000000e+00 : f32
    %39 = vector.broadcast %cst_10 : f32 to vector<16x1xf32>
    %40 = arith.select %38, %30, %39 : vector<16x1xi1>, vector<16x1xf32>
    %c0_11 = arith.constant 0 : index
    %c0_12 = arith.constant 0 : index
    %41 = vector.load %arg4[%c0_11, %c0_12] : memref<8x128xf32, #tpu.memory_space<vmem>>, vector<8x128xf32>
    %42 = vector.shape_cast %40 : vector<16x1xf32> to vector<1x16x1xf32>
    %cst_13 = arith.constant dense<0.000000e+00> : vector<1xf32>
    %43 = vector.multi_reduction <add>, %42, %cst_13 [1, 2] : vector<1x16x1xf32> to vector<1xf32>
    %44 = vector.shape_cast %43 : vector<1xf32> to vector<1x1x1xf32>
    %45 = vector.extract %44[0, 0, 0] : f32 from vector<1x1x1xf32>
    %46 = vector.broadcast %45 : f32 to vector<8x128xf32>
    %47 = arith.addf %41, %46 : vector<8x128xf32>
    %c0_14 = arith.constant 0 : index
    %c0_15 = arith.constant 0 : index
    %48 = vector.load %arg4[%c0_14, %c0_15] : memref<8x128xf32, #tpu.memory_space<vmem>>, vector<8x128xf32>
    tpu.vector_store %arg4[%c0_14, %c0_15], %47 {strides = array<i32>} : memref<8x128xf32, #tpu.memory_space<vmem>>, vector<8x128xf32>,
    %c1_i32 = arith.constant 1 : i32
    %49 = arith.cmpi eq, %arg1, %c1_i32 : i32
    %50 = arith.extui %49 : i1 to i32
    %c0_i32_16 = arith.constant 0 : i32
    %51 = arith.cmpi ne, %50, %c0_i32_16 : i32
    scf.if %51 {
      %c0_17 = arith.constant 0 : index
      %c0_18 = arith.constant 0 : index
      %52 = vector.load %arg4[%c0_17, %c0_18] : memref<8x128xf32, #tpu.memory_space<vmem>>, vector<8x128xf32>
      %cst_19 = arith.constant 2.000000e-02 : f32
      %53 = vector.broadcast %cst_19 : f32 to vector<8x128xf32>
      %54 = arith.mulf %52, %53 : vector<8x128xf32>
      %c0_20 = arith.constant 0 : index
      %c0_21 = arith.constant 0 : index
      %55 = vector.load %arg4[%c0_20, %c0_21] : memref<8x128xf32, #tpu.memory_space<vmem>>, vector<8x128xf32>
      tpu.vector_store %arg4[%c0_20, %c0_21], %54 {strides = array<i32>} : memref<8x128xf32, #tpu.memory_space<vmem>>, vector<8x128xf32>,
    } else {
    }
    return
  }
  func.func @transform_0(%arg0: i32, %arg1: i32) -> (i32, i32) {
    %c2_i32 = arith.constant 2 : i32
    %0 = arith.muli %arg0, %c2_i32 : i32
    %1 = arith.addi %0, %arg1 : i32
    %c3_i32 = arith.constant 3 : i32
    %2 = arith.minsi %1, %c3_i32 : i32
    %c0_i32 = arith.constant 0 : i32
    %c0_i32_0 = arith.constant 0 : i32
    return %2, %c0_i32 : i32, i32
  }
  func.func @transform_1(%arg0: i32, %arg1: i32) -> (i32, i32) {
    %c2_i32 = arith.constant 2 : i32
    %0 = arith.muli %arg0, %c2_i32 : i32
    %1 = arith.addi %0, %arg1 : i32
    %c3_i32 = arith.constant 3 : i32
    %2 = arith.minsi %1, %c3_i32 : i32
    %c0_i32 = arith.constant 0 : i32
    %c0_i32_0 = arith.constant 0 : i32
    return %2, %c0_i32 : i32, i32
  }
  func.func @transform_2(%arg0: i32, %arg1: i32) -> (i32, i32) {
    %c0_i32 = arith.constant 0 : i32
    %c0_i32_0 = arith.constant 0 : i32
    return %arg0, %c0_i32 : i32, i32
  }
}

</mosaic_0001>

<llo_original>
// kernel: tpu_custom_call.1
$region0: #{tpu_custom_call.1}
  #allocation0 [shape = 'u32[]', space=smem, size = 0x4, offset = 0x4, fixed_abs, tag = 'smem constant byte address 0x4 - core index']
  #allocation1 [shape = 'u32[144,128]{1,0:T(1,128)}', space=vmem, size = 0x12000, scoped, tag = 'internal scratch']
  %s0 = inlined_call_operand.vmem [shape: f32[50,32], index: 0, kind: input, shape index: {}]
  %s1 = inlined_call_operand.vmem [shape: s32[50,1], index: 1, kind: input, shape index: {}]
  %s2 = inlined_call_operand.hbm [shape: f32[16,128], index: 2, kind: output, shape index: {}]
  %s3 = sld [smem:[#allocation0]]
  $region49: #{tpu_custom_call.1} parent=0
    _
  %s5 = ssub.s32 1, %s3
  %s6 = scalar_select 0, %s5, %s3
  $region1: #{tpu_custom_call.1} parent=0
    #allocation2 [shape = 'u8[8192]{0}', space=vmem, size = 0x2000, scoped, tag = 'output window, operand 0']
    #allocation3 [shape = 's32[2]{0}', space=sflag, size = 0x8, scoped, tag = 'scoped memory for tpu_custom_call.1']
    %7 = vsyncpa [#allocation3], 0
    %s8 = scalar_lea.sflag [#allocation3], 1
    %9 = vsyncpa %s8, 0
    loop: start=0, step=1, limit=6
    $region2: #{tpu_custom_call.1} parent=1 // loop_pre_header
      _
    $region3: #{tpu_custom_call.1} parent=1 // loop_header
      %s11 = sphi 0, %s15
      %p12 = scmp.ge.s32.totalorder %s11, 6
      %s18 = sphi 0, %s30
      %s19 = sphi 0, %s26
      %s20 = sphi 0, %s18
      %s21 = sphi 0, %s19
      %s22 = sphi 0, %s20
      %s23 = sphi 0, %s21
      %s41 = sphi 0, %s43
      %s44 = sphi 0, %s41
      %s45 = sphi 0, %s44
      %s61 = sphi 0, %s45
      %s75 = sphi 0, %s77
      %s78 = sphi 0, %s75
      %s79 = sphi 0, %s78
      %s95 = sphi 0, %s79
      %s101 = sphi 0, %s103
      %s104 = sphi 0, %s101
      %s105 = sphi 0, %s104
      %s121 = sphi 0, %s105
    $region4: #{tpu_custom_call.1} parent=1 // loop_header_branch
      %14 = sbr.rel (%p12) target = $region8
    $region5: #{tpu_custom_call.1} parent=1 // loop_body
      %s16 = ssub.s32 %s11, 1
      %s17 = ssub.s32 %s11, 2
      %s24 = sadd.s32 1, %s19
      %p25 = scmp.ge.s32.totalorder %s24, 2
      %s26 = scalar_select %p25, 0, %s24
      %s27 = sadd.s32 1, %s18
      %s28 = scalar_select %p25, %s27, %s18
      %p29 = scmp.ge.s32.totalorder %s28, 2
      %s30 = scalar_select %p29, 0, %s28
      %s31 = smul.u32 %s18, 2
      %s32 = sadd.s32 %s31, %s19
      %p33 = scmp.lt.s32.totalorder %s32, 3
      %s34 = scalar_select %p33, %s32, 3
      %s35 = smul.u32 %s30, 2
      %s36 = sadd.s32 %s35, %s26
      %p37 = scmp.lt.s32.totalorder %s36, 3
      %s38 = scalar_select %p37, %s36, 3
      %s39 = ssub.s32 %s34, %s38
      %p40 = scmp.eq.s32.totalorder %s39, 0
      %s42 = sadd.s32 %s41, 1
      %s43 = scalar_select %p40, %s41, %s42
      %p46 = pneg %p40
      %p47 = scmp.eq.s32.totalorder %s11, 3
      %p48 = por %p46, %p47
      %p49 = scmp.ne.s32.totalorder %s41, %s44
      %p50 = scmp.eq.s32.totalorder %s11, 0
      %p51 = por %p49, %p50
      %p52 = scmp.ne.s32.totalorder %s41, %s44
      %p53 = scmp.eq.s32.totalorder %s16, 3
      %p54 = por %p52, %p53
      %p55 = scmp.ne.s32.totalorder %s44, %s45
      %p56 = scmp.eq.s32.totalorder %s16, 0
      %p57 = por %p55, %p56
      %p58 = scmp.ne.s32.totalorder %s44, %s45
      %p59 = scmp.eq.s32.totalorder %s17, 3
      %p60 = por %p58, %p59
      %p62 = scmp.ne.s32.totalorder %s45, %s61
      %p63 = scmp.eq.s32.totalorder %s17, 0
      %p64 = por %p62, %p63
      %s65 = smul.u32 %s18, 2
      %s66 = sadd.s32 %s65, %s19
      %p67 = scmp.lt.s32.totalorder %s66, 3
      %s68 = scalar_select %p67, %s66, 3
      %s69 = smul.u32 %s30, 2
      %s70 = sadd.s32 %s69, %s26
      %p71 = scmp.lt.s32.totalorder %s70, 3
      %s72 = scalar_select %p71, %s70, 3
      %s73 = ssub.s32 %s68, %s72
      %p74 = scmp.eq.s32.totalorder %s73, 0
      %s76 = sadd.s32 %s75, 1
      %s77 = scalar_select %p74, %s75, %s76
      %p80 = pneg %p74
      %p81 = scmp.eq.s32.totalorder %s11, 3
      %p82 = por %p80, %p81
      %p83 = scmp.ne.s32.totalorder %s75, %s78
      %p84 = scmp.eq.s32.totalorder %s11, 0
      %p85 = por %p83, %p84
      %p86 = scmp.ne.s32.totalorder %s75, %s78
      %p87 = scmp.eq.s32.totalorder %s16, 3
      %p88 = por %p86, %p87
      %p89 = scmp.ne.s32.totalorder %s78, %s79
      %p90 = scmp.eq.s32.totalorder %s16, 0
      %p91 = por %p89, %p90
      %p92 = scmp.ne.s32.totalorder %s78, %s79
      %p93 = scmp.eq.s32.totalorder %s17, 3
      %p94 = por %p92, %p93
      %p96 = scmp.ne.s32.totalorder %s79, %s95
      %p97 = scmp.eq.s32.totalorder %s17, 0
      %p98 = por %p96, %p97
      %s99 = ssub.s32 %s18, %s30
      %p100 = scmp.eq.s32.totalorder %s99, 0
      %s102 = sadd.s32 %s101, 1
      %s103 = scalar_select %p100, %s101, %s102
      %p106 = pneg %p100
      %p107 = scmp.eq.s32.totalorder %s11, 3
      %p108 = por %p106, %p107
      %p109 = scmp.ne.s32.totalorder %s101, %s104
      %p110 = scmp.eq.s32.totalorder %s11, 0
      %p111 = por %p109, %p110
      %p112 = scmp.ne.s32.totalorder %s101, %s104
      %p113 = scmp.eq.s32.totalorder %s16, 3
      %p114 = por %p112, %p113
      %p115 = scmp.ne.s32.totalorder %s104, %s105
      %p116 = scmp.eq.s32.totalorder %s16, 0
      %p117 = por %p115, %p116
      %p118 = scmp.ne.s32.totalorder %s104, %s105
      %p119 = scmp.eq.s32.totalorder %s17, 3
      %p120 = por %p118, %p119
      %p122 = scmp.ne.s32.totalorder %s105, %s121
      %p123 = scmp.eq.s32.totalorder %s17, 0
      %p124 = por %p122, %p123
      %p125 = scmp.le.s32.totalorder 1, %s11
      %p126 = scmp.lt.s32.totalorder %s11, 5
      %p127 = pnand %p125, %p126
      %p128 = pneg %p127
      // Predicated region
      $region9: #{tpu_custom_call.1} parent=5 // pred_check
        _
      $region10: #{tpu_custom_call.1} parent=5 // pred_check_branch
        %130 = sbr.rel (%p127) target = $region12
      $region11: #{tpu_custom_call.1} parent=5 // pred_region
        %s131 = ssub.s32 %s11, 1
      $region12: #{tpu_custom_call.1} parent=5 // pred_fallthru
        _
      %p132 = scmp.lt.s32.totalorder %s11, 4
      // Predicated region
      $region13: #{tpu_custom_call.1} parent=5 // pred_check
        %p133 = pneg %p132
      $region14: #{tpu_custom_call.1} parent=5 // pred_check_branch
        %135 = sbr.rel (%p133) target = $region16
      $region15: #{tpu_custom_call.1} parent=5 // pred_region
        // Predicated region
        $region17: #{tpu_custom_call.1} parent=15 // pred_check
          %p136 = pneg %p51
        $region18: #{tpu_custom_call.1} parent=15 // pred_check_branch
          %138 = sbr.rel (%p136) target = $region20
        $region19: #{tpu_custom_call.1} parent=15 // pred_region
          %s139 = smul.u32 %s18, 2
          %s140 = sadd.s32 %s139, %s19
          %p141 = scmp.lt.s32.totalorder %s140, 3
          %s142 = scalar_select %p141, %s140, 3
          %s143 = smul.u32 2, %s142
          %s144 = ssub.s32 7, %s143
          %p145 = scmp.lt.s32.totalorder %s144, 2
          %s146 = scalar_select %p145, %s144, 2
          %s147 = smul.u32 128, %s146
          %p148 = scmp.lt.s32.totalorder %s143, 6
          %s149 = scalar_select %p148, %s143, 6
          %s150 = smul.addr %s149, 8
          %s151 = scalar_lea.vmem %s0, %s150
          %s152 = smul.u32 %s18, 2
          %s153 = sadd.s32 %s152, %s19
          %p154 = scmp.lt.s32.totalorder %s153, 3
          %s155 = scalar_select %p154, %s153, 3
          %s156 = smul.u32 2, %s155
          %s157 = ssub.s32 7, %s156
          %p158 = scmp.lt.s32.totalorder %s157, 2
          %s159 = scalar_select %p158, %s157, 2
          %s160 = smul.u32 128, %s159
        $region20: #{tpu_custom_call.1} parent=15 // pred_fallthru
          _
        // Predicated region
        $region21: #{tpu_custom_call.1} parent=15 // pred_check
          %p161 = pneg %p85
        $region22: #{tpu_custom_call.1} parent=15 // pred_check_branch
          %163 = sbr.rel (%p161) target = $region24
        $region23: #{tpu_custom_call.1} parent=15 // pred_region
          %s164 = smul.u32 %s18, 2
          %s165 = sadd.s32 %s164, %s19
          %p166 = scmp.lt.s32.totalorder %s165, 3
          %s167 = scalar_select %p166, %s165, 3
          %s168 = smul.u32 2, %s167
          %s169 = ssub.s32 7, %s168
          %p170 = scmp.lt.s32.totalorder %s169, 2
          %s171 = scalar_select %p170, %s169, 2
          %s172 = smul.u32 128, %s171
          %p173 = scmp.lt.s32.totalorder %s168, 6
          %s174 = scalar_select %p173, %s168, 6
          %s175 = smul.addr %s174, 8
          %s176 = scalar_lea.vmem %s1, %s175
          %s177 = smul.u32 %s18, 2
          %s178 = sadd.s32 %s177, %s19
          %p179 = scmp.lt.s32.totalorder %s178, 3
          %s180 = scalar_select %p179, %s178, 3
          %s181 = smul.u32 2, %s180
          %s182 = ssub.s32 7, %s181
          %p183 = scmp.lt.s32.totalorder %s182, 2
          %s184 = scalar_select %p183, %s182, 2
          %s185 = smul.u32 128, %s184
        $region24: #{tpu_custom_call.1} parent=15 // pred_fallthru
          _
      $region16: #{tpu_custom_call.1} parent=5 // pred_fallthru
        _
      %p186 = scmp.le.s32.totalorder 1, %s11
      %p187 = scmp.lt.s32.totalorder %s11, 5
      %p188 = pnand %p186, %p187
      %p189 = pneg %p188
      // Predicated region
      $region25: #{tpu_custom_call.1} parent=5 // pred_check
        _
      $region26: #{tpu_custom_call.1} parent=5 // pred_check_branch
        %191 = sbr.rel (%p188) target = $region28
      $region27: #{tpu_custom_call.1} parent=5 // pred_region
        %s192 = ssub.s32 %s11, 1
        %s193 = smul.u32 %s20, 2
        %s194 = sadd.s32 %s193, %s21
        %p195 = scmp.lt.s32.totalorder %s194, 3
        %s196 = scalar_select %p195, %s194, 3
        %s197 = smul.u32 2, %s196
        %s198 = ssub.s32 7, %s197
        %p199 = scmp.lt.s32.totalorder %s198, 2
        %s200 = scalar_select %p199, %s198, 2
        %s201 = smul.u32 128, %s200
        %p202 = scmp.lt.s32.totalorder %s197, 6
        %s203 = scalar_select %p202, %s197, 6
        %s204 = smul.addr %s203, 8
        %s205 = scalar_lea.vmem %s0, %s204
        %p206 = pneg %p57
        %p207 = pneg %p54
        %s208 = smul.u32 %s20, 2
        %s209 = sadd.s32 %s208, %s21
        %p210 = scmp.lt.s32.totalorder %s209, 3
        %s211 = scalar_select %p210, %s209, 3
        %s212 = smul.u32 2, %s211
        %s213 = ssub.s32 7, %s212
        %p214 = scmp.lt.s32.totalorder %s213, 2
        %s215 = scalar_select %p214, %s213, 2
        %s216 = smul.u32 128, %s215
        %p217 = scmp.lt.s32.totalorder %s212, 6
        %s218 = scalar_select %p217, %s212, 6
        %s219 = smul.addr %s218, 8
        %s220 = scalar_lea.vmem %s1, %s219
        %p221 = pneg %p91
        %p222 = pneg %p88
        %p223 = pneg %p117
        %p224 = pneg %p114
        %s225 = sand.u32 %s104, 1
        %s226 = scalar_lea.sflag [#allocation3], %s225
        %s227 = sand.u32 %s104, 1
        %s228 = smul.addr %s227, 8
        %s229 = scalar_lea.vmem [#allocation2], %s228
        %s230 = smul.u32 %s20, 2
        %s231 = sadd.s32 %s230, %s21
        %p232 = scmp.lt.s32.totalorder %s231, 3
        %s233 = scalar_select %p232, %s231, 3
        %s234 = smul.u32 2, %s233
        %s235 = ssub.s32 7, %s234
        %p236 = scmp.lt.s32.totalorder %s235, 2
        %s237 = scalar_select %p236, %s235, 2
        %s238 = smul.u32 128, %s237
        %p239 = scmp.lt.s32.totalorder %s234, 6
        %s240 = scalar_select %p239, %s234, 6
        %s241 = smul.addr %s240, 8
        %s242 = scalar_lea.vmem %s0, %s241
        %s243 = smul.u32 %s20, 2
        %s244 = sadd.s32 %s243, %s21
        %p245 = scmp.lt.s32.totalorder %s244, 3
        %s246 = scalar_select %p245, %s244, 3
        %s247 = smul.u32 2, %s246
        %s248 = ssub.s32 7, %s247
        %p249 = scmp.lt.s32.totalorder %s248, 2
        %s250 = scalar_select %p249, %s248, 2
        %s251 = smul.u32 128, %s250
        %s252 = smul.u32 %s20, 2
        %s253 = sadd.s32 %s252, %s21
        %p254 = scmp.lt.s32.totalorder %s253, 3
        %s255 = scalar_select %p254, %s253, 3
        %s256 = smul.u32 2, %s255
        %s257 = ssub.s32 7, %s256
        %p258 = scmp.lt.s32.totalorder %s257, 2
        %s259 = scalar_select %p258, %s257, 2
        %s260 = smul.u32 128, %s259
        %p261 = scmp.lt.s32.totalorder %s256, 6
        %s262 = scalar_select %p261, %s256, 6
        %s263 = smul.addr %s262, 8
        %s264 = scalar_lea.vmem %s1, %s263
        %s265 = smul.u32 %s20, 2
        %s266 = sadd.s32 %s265, %s21
        %p267 = scmp.lt.s32.totalorder %s266, 3
        %s268 = scalar_select %p267, %s266, 3
        %s269 = smul.u32 2, %s268
        %s270 = ssub.s32 7, %s269
        %p271 = scmp.lt.s32.totalorder %s270, 2
        %s272 = scalar_select %p271, %s270, 2
        %s273 = smul.u32 128, %s272
        %p274 = scmp.eq.s32.totalorder %s21, 0
        // Predicated region
        $region29: #{tpu_custom_call.1} parent=27 // pred_check
          %p275 = pneg %p274
        $region30: #{tpu_custom_call.1} parent=27 // pred_check_branch
          %277 = sbr.rel (%p275) target = $region32
        $region31: #{tpu_custom_call.1} parent=27 // pred_region
          %278 = vst [vmem:[%s229] sm:$0xff] 0.0
        $region32: #{tpu_custom_call.1} parent=27 // pred_fallthru
          _
        %v279 = vld [vmem:[%s242] sm:$0xff]
        %v280 = vld [vmem:[%s242 + $0x8] sm:$0xff]
        %v281 = vld [vmem:[%s264] sm:$0xff]
        %v282 = vld [vmem:[%s264 + $0x8] sm:$0xff]
        %vm283 = vcmask 261120
        %v284 = vsel %vm283, %v279, -inf
        %285 = vmax.xlane.f32.xlu0 %v284
        %v286 = vpop.xlane.xlu0 %285
        %v287 = vsel %vm283, %v280, -inf
        %288 = vmax.xlane.f32.xlu0 %v287
        %v289 = vpop.xlane.xlu0 %288
        %v290 = vsub.f32 %v279, %v286
        %v291 = vsub.f32 %v280, %v289
        %v292 = vmul.f32 %v290, 1.442695
        %v293 = vpow.pop %v292
        %v294 = vmul.f32 %v291, 1.442695
        %v295 = vpow.pop %v294
        %v296 = vsel %vm283, %v293, 0.0
        %297 = vadd.xlane.f32.xlu0 %v296
        %v298 = vpop.xlane.xlu0 %297
        %v299 = vsel %vm283, %v295, 0.0
        %300 = vadd.xlane.f32.xlu0 %v299
        %v301 = vpop.xlane.xlu0 %300
        %v302 = vlog2.pop %v298
        %v303 = vmul.f32 %v302, 0.6931472
        %v304 = vlog2.pop %v301
        %v305 = vmul.f32 %v304, 0.6931472
        %v306 = vadd.f32 %v286, %v303
        %v307 = vadd.f32 %v289, %v305
        %v308 = vlaneseq
        %v309 = vand.u32 %v308, 127
        %310 = vset.pattern.permute.xlu0 0
        %311 = vperm.xlu0 %310, %v281
        %v312 = vpop.permute.xlu0 %311
        %313 = vset.pattern.permute.xlu0 0
        %314 = vperm.xlu0 %313, %v282
        %v315 = vpop.permute.xlu0 %314
        %vm316 = vcmp.eq.s32.totalorder %v309, %v312
        %vm317 = vcmp.eq.s32.totalorder %v309, %v315
        %v318 = vsel %vm316, %v279, 0.0
        %v319 = vsel %vm317, %v280, 0.0
        %v320 = vsel %vm283, %v318, 0.0
        %321 = vadd.xlane.f32.xlu0 %v320
        %v322 = vpop.xlane.xlu0 %321
        %v323 = vsel %vm283, %v319, 0.0
        %324 = vadd.xlane.f32.xlu0 %v323
        %v325 = vpop.xlane.xlu0 %324
        %v326 = vsub.f32 %v306, %v322
        %v327 = vsub.f32 %v307, %v325
        %v328 = vsub.f32 0.0, %v326
        %v329 = vsub.f32 0.0, %v327
        %v330 = vmul.f32 %v328, 1.442695
        %v331 = vpow.pop %v330
        %v332 = vmul.f32 %v329, 1.442695
        %v333 = vpow.pop %v332
        %v334 = vsub.f32 1.0, %v331
        %v335 = vsub.f32 1.0, %v333
        %v336 = vmul.f32 %v334, %v334
        %v337 = vmul.f32 %v335, %v335
        %v338 = vmul.f32 %v336, %v326
        %v339 = vmul.f32 %v337, %v327
        %s340 = smul.u32 %s20, 2
        %s341 = sadd.s32 %s340, %s21
        %s342 = smul.u32 %s341, 16
        %v343 = vlaneseq
        %v344 = vshrl.u32 %v343, 7
        %v345 = vadd.s32 %v344, 8
        %v346 = vstv %s342
        %v347 = vadd.s32 %v346, %v344
        %v348 = vadd.s32 %v346, %v345
        %vm349 = vcmp.lt.s32.totalorder %v347, 50
        %vm350 = vcmp.lt.s32.totalorder %v348, 50
        %v351 = vsel %vm349, %v338, 0.0
        %v352 = vsel %vm350, %v339, 0.0
        %v353 = vld [vmem:[%s229] sm:$0xff]
        %vm354 = vcmask 7168
        %v355 = vsel %vm354, %v351, 0.0
        %v356 = vsel %vm354, %v352, 0.0
        %v357 = vadd.f32 %v355, %v356
        %358 = vadd.xlane.f32.xlu0 %v357
        %v359 = vpop.xlane.xlu0 %358
        %v360 = vrot.slane %v359, 4
        %v361 = vadd.f32 %v359, %v360
        %v362 = vrot.slane %v361, 2
        %v363 = vadd.f32 %v361, %v362
        %v364 = vrot.slane %v363, 1
        %v365 = vadd.f32 %v363, %v364
        %s366 = vtos %v365
        %v367 = vstv %s366
        %v368 = vadd.f32 %v353, %v367
        %369 = vst [vmem:[%s229] sm:$0xff] %v368
        %p370 = scmp.eq.s32.totalorder %s21, 1
        // Predicated region
        $region33: #{tpu_custom_call.1} parent=27 // pred_check
          %p371 = pneg %p370
        $region34: #{tpu_custom_call.1} parent=27 // pred_check_branch
          %373 = sbr.rel (%p371) target = $region36
        $region35: #{tpu_custom_call.1} parent=27 // pred_region
          %v374 = vld [vmem:[%s229] sm:$0xff]
          %v375 = vmul.f32 %v374, 0.02
          %376 = vst [vmem:[%s229] sm:$0xff] %v375
        $region36: #{tpu_custom_call.1} parent=27 // pred_fallthru
          _
        %s377 = sand.u32 %s104, 1
        %s378 = scalar_lea.sflag [#allocation3], %s377
        %s379 = sand.u32 %s104, 1
        %s380 = smul.addr %s379, 8
        %s381 = scalar_lea.vmem [#allocation2], %s380
        // Predicated region
        $region37: #{tpu_custom_call.1} parent=27 // pred_check
          %p382 = pneg %p114
        $region38: #{tpu_custom_call.1} parent=27 // pred_check_branch
          %384 = sbr.rel (%p382) target = $region40
        $region39: #{tpu_custom_call.1} parent=27 // pred_region
          %s386 = ssub.s32 128, 128
          %387 = vsyncadd %s378, %s386
          %s388 = smul.addr %s20, 128
          %s389 = scalar_lea.hbm %s2, %s388
          %s391 = sshll.u32 %s381, 4
          %s392 = int_to_ptr.vmem [resolvable:$true] %s391
          %394 = dma.vmem_to_hbm [thread:$0]  %s392, 128, %s389, %s378
        $region40: #{tpu_custom_call.1} parent=27 // pred_fallthru
          _
      $region28: #{tpu_custom_call.1} parent=5 // pred_fallthru
        _
      %p395 = scmp.le.s32.totalorder 2, %s11
      // Predicated region
      $region41: #{tpu_custom_call.1} parent=5 // pred_check
        %p396 = pneg %p395
      $region42: #{tpu_custom_call.1} parent=5 // pred_check_branch
        %398 = sbr.rel (%p396) target = $region44
      $region43: #{tpu_custom_call.1} parent=5 // pred_region
        %s399 = ssub.s32 %s11, 2
        // Predicated region
        $region45: #{tpu_custom_call.1} parent=43 // pred_check
          %p400 = pneg %p120
        $region46: #{tpu_custom_call.1} parent=43 // pred_check_branch
          %402 = sbr.rel (%p400) target = $region48
        $region47: #{tpu_custom_call.1} parent=43 // pred_region
          %s403 = sand.u32 %s105, 1
          %s404 = scalar_lea.sflag [#allocation3], %s403
          %s405 = sand.u32 %s105, 1
          %s406 = smul.addr %s405, 8
          %s407 = scalar_lea.vmem [#allocation2], %s406
          %408 = dma.done %s404, 128
        $region48: #{tpu_custom_call.1} parent=43 // pred_fallthru
          _
      $region44: #{tpu_custom_call.1} parent=5 // pred_fallthru
        _
    $region6: #{tpu_custom_call.1} parent=1 // loop_footer
      %s15 = sadd.s32 1, %s11
    $region7: #{tpu_custom_call.1} parent=1 // loop_footer_branch
      %10 = sbr.rel target = $region3
    $region8: #{tpu_custom_call.1} parent=1 // loop_exit
      _
    %409 = vsyncpa [#allocation3], 1
    %s410 = scalar_lea.sflag [#allocation3], 1
    %411 = vsyncpa %s410, 1

</llo_original>
